<compile_context>
chip_gen: v7x
topology: tpu7x:2x2x1
jax: 0.10.0
libtpu: 0.0.40
codegen_flags: <defaults>
</compile_context>

<pallas_src>
import jax
import jax.numpy as jnp
from jax.experimental import pallas as pl
from jax.experimental.pallas import tpu as pltpu

LANE = 128             # TPU vreg lane width; hidden feature dims padded to this.
MAX_BATCH_TILE = 4096  # large batch tiles amortize the ~0.35us/grid-step overhead.


def _round_up(n, m):
    return ((n + m - 1) // m) * m


def mlp_kernel(x_ref, w1_ref, b1_ref, w2_ref, b2_ref, w3_ref, b3_ref,
               w4_ref, b4_ref, o_ref):
    """Fully fused 4-layer MLP on one batch tile (everything resident in VMEM)."""
    h = jnp.dot(x_ref[...], w1_ref[...],
                preferred_element_type=jnp.float32) + b1_ref[...]
    h = jax.nn.sigmoid(h)
    h = jnp.dot(h, w2_ref[...],
                preferred_element_type=jnp.float32) + b2_ref[...]
    h = jax.nn.sigmoid(h)
    h = jnp.dot(h, w3_ref[...],
                preferred_element_type=jnp.float32) + b3_ref[...]
    h = jax.nn.sigmoid(h)
    y = jnp.dot(h, w4_ref[...],
                preferred_element_type=jnp.float32) + b4_ref[...]
    o_ref[...] = y.astype(o_ref.dtype)


def prepare_params(params):
    """One-time layout work (NOT per forward call).

    Takes torch-style [(W(out,in), b(out)), ...] and returns
    [(W_t(in_dim, out_dim), b(1, out_dim)), ...] where hidden out dims are
    zero-padded to the 128-lane width but the FIRST layer's input dim and the
    LAST layer's output dim are left unpadded.  Padding is exact: padded
    activation lanes hold sigmoid(0)=0.5 but only ever multiply zero weight
    rows downstream, so padded lanes never contribute to real outputs.
    """
    n = len(params)
    prepped = []
    prev_out = None
    for i, (w, b) in enumerate(params):
        out_f, in_f = w.shape
        in_dim = in_f if i == 0 else prev_out          # x feature dim unpadded
        out_dim = out_f if i == n - 1 else _round_up(out_f, LANE)  # last layer unpadded
        wt = jnp.zeros((in_dim, out_dim), w.dtype).at[:in_f, :out_f].set(w.T)
        bt = jnp.zeros((1, out_dim), b.dtype).at[0, :out_f].set(b)
        prepped.append((wt, bt))
        prev_out = out_dim
    return prepped


@jax.jit
def neural_net_forward(x, prepped_params):
    """x: (batch, input_size) f32; prepped_params from prepare_params()."""
    (w1, b1), (w2, b2), (w3, b3), (w4, b4) = prepped_params
    batch, in_f = x.shape
    h1, h2, h3 = w1.shape[1], w2.shape[1], w3.shape[1]
    out_f = w4.shape[1]

    # Batch tiling: round batch to a multiple of 8, then size the tile so the
    # grid covers it with bounded (<8 rows/tile) padding waste instead of up to
    # tb-1 garbage rows.  Skip the pad copy when nothing needs padding.
    batch8 = _round_up(batch, 8)
    n_tiles = pl.cdiv(batch8, MAX_BATCH_TILE)
    tb = _round_up(pl.cdiv(batch8, n_tiles), 8)
    padded_batch = tb * n_tiles
    if padded_batch != batch:
        x = jnp.pad(x, ((0, padded_batch - batch), (0, 0)))
    grid = (n_tiles,)

    def resident(shape):
        # Same block index every grid step -> weights/biases stay in VMEM.
        return pl.BlockSpec(shape, lambda i: (0, 0))

    in_specs = [
        pl.BlockSpec((tb, in_f), lambda i: (i, 0)),
        resident(w1.shape), resident(b1.shape),
        resident(w2.shape), resident(b2.shape),
        resident(w3.shape), resident(b3.shape),
        resident(w4.shape), resident(b4.shape),
    ]
    # Last block dim == full array dim (out_f), so this is legal even though
    # out_f < 128; the masked store is far cheaper than padded-output writeback.
    out_spec = pl.BlockSpec((tb, out_f), lambda i: (i, 0))

    n_param_elems = sum(w.size + b.size for w, b in prepped_params)
    cost = pl.CostEstimate(
        flops=2 * padded_batch * (in_f * h1 + h1 * h2 + h2 * h3 + h3 * out_f),
        transcendentals=padded_batch * (h1 + h2 + h3),
        bytes_accessed=4 * (padded_batch * (in_f + out_f) + n_param_elems),
    )

    out = pl.pallas_call(
        mlp_kernel,
        out_shape=jax.ShapeDtypeStruct((padded_batch, out_f), x.dtype),
        grid=grid,
        in_specs=in_specs,
        out_specs=out_spec,
        compiler_params=pltpu.CompilerParams(
            # TODO(synk): on v7x, switch to pltpu.CORE_PARALLEL (or a core_map
            # mesh) if xprof shows the batch grid running on a single TC.
            dimension_semantics=("parallel",),
            vmem_limit_bytes=32 * 1024 * 1024,  # <10 MiB used even at tb=4096
        ),
        cost_estimate=cost,
    )(x, w1, b1, w2, b2, w3, b3, w4, b4)

    # Strip batch padding only (output feature dim is already exact).
    if padded_batch != batch:
        out = out[:batch]
    return out


def init_linear(key, in_features, out_features):
    # Deterministic init mimicking torch.nn.Linear default:
    # U(-1/sqrt(in), 1/sqrt(in)) for both weight and bias.
    kw, kb = jax.random.split(key)
    bound = 1.0 / (in_features ** 0.5)
    w = jax.random.uniform(kw, (out_features, in_features), jnp.float32,
                           minval=-bound, maxval=bound)
    b = jax.random.uniform(kb, (out_features,), jnp.float32,
                           minval=-bound, maxval=bound)
    return w, b


def reference_forward(x, params):
    h = x
    for i, (w, b) in enumerate(params):
        h = h @ w.T + b
        if i < len(params) - 1:
            h = jax.nn.sigmoid(h)
    return h


if __name__ == "__main__":
    batch = 8
    input_size = 16
    hidden_size = 32
    output_size = 4

    key = jax.random.PRNGKey(0)
    kx, k1, k2, k3, k4 = jax.random.split(key, 5)

    x = jax.random.normal(kx, (batch, input_size), jnp.float32)
    params = [
        init_linear(k1, input_size, hidden_size),
        init_linear(k2, hidden_size, hidden_size),
        init_linear(k3, hidden_size, hidden_size),
        init_linear(k4, hidden_size, output_size),
    ]

    prepped = prepare_params(params)   # one-time layout work (no per-call transposes)

    out = neural_net_forward(x, prepped)
    jax.block_until_ready(out)

    ref = reference_forward(x, params)
    assert out.shape == (batch, output_size), out.shape
    assert jnp.allclose(out, ref, atol=1e-5, rtol=1e-5), \
        float(jnp.max(jnp.abs(out - ref)))

    print("KERNEL_OK")
</pallas_src>

<mosaic_0001>
module attributes {stable_mosaic.version = 11 : i64} {
  func.func @mlp_kernel(%arg0: i32, %arg1: memref<8x16xf32, #tpu.memory_space<vmem>>, %arg2: memref<16x128xf32, #tpu.memory_space<vmem>>, %arg3: memref<1x128xf32, #tpu.memory_space<vmem>>, %arg4: memref<128x128xf32, #tpu.memory_space<vmem>>, %arg5: memref<1x128xf32, #tpu.memory_space<vmem>>, %arg6: memref<128x128xf32, #tpu.memory_space<vmem>>, %arg7: memref<1x128xf32, #tpu.memory_space<vmem>>, %arg8: memref<128x4xf32, #tpu.memory_space<vmem>>, %arg9: memref<1x4xf32, #tpu.memory_space<vmem>>, %arg10: memref<8x4xf32, #tpu.memory_space<vmem>>) attributes {dimension_semantics = [#tpu.dimension_semantics<parallel>], iteration_bounds = array<i64: 1>, scalar_prefetch = 0 : i64, scratch_operands = 0 : i64, tpu.core_type = #tpu.core_type<tc>, window_params = [{transform_indices = @transform_0, window_bounds = array<i64: 8, 16>}, {pipeline_mode = #tpu.pipeline_mode<synchronous>, transform_indices = @transform_1, window_bounds = array<i64: 16, 128>}, {pipeline_mode = #tpu.pipeline_mode<synchronous>, transform_indices = @transform_2, window_bounds = array<i64: 1, 128>}, {pipeline_mode = #tpu.pipeline_mode<synchronous>, transform_indices = @transform_3, window_bounds = array<i64: 128, 128>}, {pipeline_mode = #tpu.pipeline_mode<synchronous>, transform_indices = @transform_4, window_bounds = array<i64: 1, 128>}, {pipeline_mode = #tpu.pipeline_mode<synchronous>, transform_indices = @transform_5, window_bounds = array<i64: 128, 128>}, {pipeline_mode = #tpu.pipeline_mode<synchronous>, transform_indices = @transform_6, window_bounds = array<i64: 1, 128>}, {pipeline_mode = #tpu.pipeline_mode<synchronous>, transform_indices = @transform_7, window_bounds = array<i64: 128, 4>}, {pipeline_mode = #tpu.pipeline_mode<synchronous>, transform_indices = @transform_8, window_bounds = array<i64: 1, 4>}, {transform_indices = @transform_9, window_bounds = array<i64: 8, 4>}]} {
    %c0 = arith.constant 0 : index
    %c0_0 = arith.constant 0 : index
    %0 = vector.load %arg1[%c0, %c0_0] : memref<8x16xf32, #tpu.memory_space<vmem>>, vector<8x16xf32>
    %c0_1 = arith.constant 0 : index
    %c0_2 = arith.constant 0 : index
    %1 = vector.load %arg2[%c0_1, %c0_2] : memref<16x128xf32, #tpu.memory_space<vmem>>, vector<16x128xf32>
    %cst = arith.constant dense<0.000000e+00> : vector<8x128xf32>
    %2 = tpu.matmul %0, %1, %cst {dimension_numbers = #tpu.dot_dimension_numbers<[1], [0], [0], [1], [0, 0, 1, 1], [], []>} : vector<8x16xf32>, vector<16x128xf32>, vector<8x128xf32> -> vector<8x128xf32>
    %c0_3 = arith.constant 0 : index
    %c0_4 = arith.constant 0 : index
    %3 = vector.load %arg3[%c0_3, %c0_4] : memref<1x128xf32, #tpu.memory_space<vmem>>, vector<1x128xf32>
    %4 = vector.broadcast %3 : vector<1x128xf32> to vector<8x128xf32>
    %5 = arith.addf %2, %4 : vector<8x128xf32>
    %6 = arith.negf %5 : vector<8x128xf32>
    %7 = math.exp %6 : vector<8x128xf32>
    %cst_5 = arith.constant 1.000000e+00 : f32
    %8 = vector.broadcast %cst_5 : f32 to vector<8x128xf32>
    %9 = arith.addf %8, %7 : vector<8x128xf32>
    %10 = arith.divf %8, %9 : vector<8x128xf32>
    %c0_6 = arith.constant 0 : index
    %c0_7 = arith.constant 0 : index
    %11 = vector.load %arg4[%c0_6, %c0_7] : memref<128x128xf32, #tpu.memory_space<vmem>>, vector<128x128xf32>
    %cst_8 = arith.constant dense<0.000000e+00> : vector<8x128xf32>
    %12 = tpu.matmul %10, %11, %cst_8 {dimension_numbers = #tpu.dot_dimension_numbers<[1], [0], [0], [1], [0, 0, 1, 1], [], []>} : vector<8x128xf32>, vector<128x128xf32>, vector<8x128xf32> -> vector<8x128xf32>
    %c0_9 = arith.constant 0 : index
    %c0_10 = arith.constant 0 : index
    %13 = vector.load %arg5[%c0_9, %c0_10] : memref<1x128xf32, #tpu.memory_space<vmem>>, vector<1x128xf32>
    %14 = vector.broadcast %13 : vector<1x128xf32> to vector<8x128xf32>
    %15 = arith.addf %12, %14 : vector<8x128xf32>
    %16 = arith.negf %15 : vector<8x128xf32>
    %17 = math.exp %16 : vector<8x128xf32>
    %cst_11 = arith.constant 1.000000e+00 : f32
    %18 = vector.broadcast %cst_11 : f32 to vector<8x128xf32>
    %19 = arith.addf %18, %17 : vector<8x128xf32>
    %20 = arith.divf %18, %19 : vector<8x128xf32>
    %c0_12 = arith.constant 0 : index
    %c0_13 = arith.constant 0 : index
    %21 = vector.load %arg6[%c0_12, %c0_13] : memref<128x128xf32, #tpu.memory_space<vmem>>, vector<128x128xf32>
    %cst_14 = arith.constant dense<0.000000e+00> : vector<8x128xf32>
    %22 = tpu.matmul %20, %21, %cst_14 {dimension_numbers = #tpu.dot_dimension_numbers<[1], [0], [0], [1], [0, 0, 1, 1], [], []>} : vector<8x128xf32>, vector<128x128xf32>, vector<8x128xf32> -> vector<8x128xf32>
    %c0_15 = arith.constant 0 : index
    %c0_16 = arith.constant 0 : index
    %23 = vector.load %arg7[%c0_15, %c0_16] : memref<1x128xf32, #tpu.memory_space<vmem>>, vector<1x128xf32>
    %24 = vector.broadcast %23 : vector<1x128xf32> to vector<8x128xf32>
    %25 = arith.addf %22, %24 : vector<8x128xf32>
    %26 = arith.negf %25 : vector<8x128xf32>
    %27 = math.exp %26 : vector<8x128xf32>
    %cst_17 = arith.constant 1.000000e+00 : f32
    %28 = vector.broadcast %cst_17 : f32 to vector<8x128xf32>
    %29 = arith.addf %28, %27 : vector<8x128xf32>
    %30 = arith.divf %28, %29 : vector<8x128xf32>
    %c0_18 = arith.constant 0 : index
    %c0_19 = arith.constant 0 : index
    %31 = vector.load %arg8[%c0_18, %c0_19] : memref<128x4xf32, #tpu.memory_space<vmem>>, vector<128x4xf32>
    %cst_20 = arith.constant dense<0.000000e+00> : vector<8x4xf32>
    %32 = tpu.matmul %30, %31, %cst_20 {dimension_numbers = #tpu.dot_dimension_numbers<[1], [0], [0], [1], [0, 0, 1, 1], [], []>} : vector<8x128xf32>, vector<128x4xf32>, vector<8x4xf32> -> vector<8x4xf32>
    %c0_21 = arith.constant 0 : index
    %c0_22 = arith.constant 0 : index
    %33 = vector.load %arg9[%c0_21, %c0_22] : memref<1x4xf32, #tpu.memory_space<vmem>>, vector<1x4xf32>
    %34 = vector.broadcast %33 : vector<1x4xf32> to vector<8x4xf32>
    %35 = arith.addf %32, %34 : vector<8x4xf32>
    %c0_23 = arith.constant 0 : index
    %c0_24 = arith.constant 0 : index
    %36 = vector.load %arg10[%c0_23, %c0_24] : memref<8x4xf32, #tpu.memory_space<vmem>>, vector<8x4xf32>
    tpu.vector_store %arg10[%c0_23, %c0_24], %35 {strides = array<i32>} : memref<8x4xf32, #tpu.memory_space<vmem>>, vector<8x4xf32>,
    return
  }
  func.func @transform_0(%arg0: i32) -> (i32, i32) {
    %c0_i32 = arith.constant 0 : i32
    %c0_i32_0 = arith.constant 0 : i32
    return %arg0, %c0_i32 : i32, i32
  }
  func.func @transform_1(%arg0: i32) -> (i32, i32) {
    %c0_i32 = arith.constant 0 : i32
    %c0_i32_0 = arith.constant 0 : i32
    %c0_i32_1 = arith.constant 0 : i32
    return %c0_i32, %c0_i32_0 : i32, i32
  }
  func.func @transform_2(%arg0: i32) -> (i32, i32) {
    %c0_i32 = arith.constant 0 : i32
    %c0_i32_0 = arith.constant 0 : i32
    %c0_i32_1 = arith.constant 0 : i32
    return %c0_i32, %c0_i32_0 : i32, i32
  }
  func.func @transform_3(%arg0: i32) -> (i32, i32) {
    %c0_i32 = arith.constant 0 : i32
    %c0_i32_0 = arith.constant 0 : i32
    %c0_i32_1 = arith.constant 0 : i32
    return %c0_i32, %c0_i32_0 : i32, i32
  }
  func.func @transform_4(%arg0: i32) -> (i32, i32) {
    %c0_i32 = arith.constant 0 : i32
    %c0_i32_0 = arith.constant 0 : i32
    %c0_i32_1 = arith.constant 0 : i32
    return %c0_i32, %c0_i32_0 : i32, i32
  }
  func.func @transform_5(%arg0: i32) -> (i32, i32) {
    %c0_i32 = arith.constant 0 : i32
    %c0_i32_0 = arith.constant 0 : i32
    %c0_i32_1 = arith.constant 0 : i32
    return %c0_i32, %c0_i32_0 : i32, i32
  }
  func.func @transform_6(%arg0: i32) -> (i32, i32) {
    %c0_i32 = arith.constant 0 : i32
    %c0_i32_0 = arith.constant 0 : i32
    %c0_i32_1 = arith.constant 0 : i32
    return %c0_i32, %c0_i32_0 : i32, i32
  }
  func.func @transform_7(%arg0: i32) -> (i32, i32) {
    %c0_i32 = arith.constant 0 : i32
    %c0_i32_0 = arith.constant 0 : i32
    %c0_i32_1 = arith.constant 0 : i32
    return %c0_i32, %c0_i32_0 : i32, i32
  }
  func.func @transform_8(%arg0: i32) -> (i32, i32) {
    %c0_i32 = arith.constant 0 : i32
    %c0_i32_0 = arith.constant 0 : i32
    %c0_i32_1 = arith.constant 0 : i32
    return %c0_i32, %c0_i32_0 : i32, i32
  }
  func.func @transform_9(%arg0: i32) -> (i32, i32) {
    %c0_i32 = arith.constant 0 : i32
    %c0_i32_0 = arith.constant 0 : i32
    return %arg0, %c0_i32 : i32, i32
  }
}

</mosaic_0001>

<llo_original>
// kernel: neural_net_forward.1
$region0: #{neural_net_forward.1}
  #allocation0 [shape = 'u32[]', space=smem, size = 0x4, offset = 0x4, fixed_abs, tag = 'smem constant byte address 0x4 - core index']
  #allocation1 [shape = 'u32[144,128]{1,0:T(1,128)}', space=vmem, size = 0x12000, scoped, tag = 'internal scratch']
  %s0 = inlined_call_operand.vmem [shape: f32[8,16], index: 0, kind: input, shape index: {}]
  %s1 = inlined_call_operand.hbm [shape: f32[16,128], index: 1, kind: input, shape index: {}]
  %s2 = inlined_call_operand.vmem [shape: f32[1,128], index: 2, kind: input, shape index: {}]
  %s3 = inlined_call_operand.vmem [shape: f32[128,128], index: 3, kind: input, shape index: {}]
  %s4 = inlined_call_operand.vmem [shape: f32[1,128], index: 4, kind: input, shape index: {}]
  %s5 = inlined_call_operand.hbm [shape: f32[128,128], index: 5, kind: input, shape index: {}]
  %s6 = inlined_call_operand.vmem [shape: f32[1,128], index: 6, kind: input, shape index: {}]
  %s7 = inlined_call_operand.vmem [shape: f32[128,4], index: 7, kind: input, shape index: {}]
  %s8 = inlined_call_operand.vmem [shape: f32[1,4], index: 8, kind: input, shape index: {}]
  %s9 = inlined_call_operand.vmem [shape: f32[8,4], index: 9, kind: output, shape index: {}]
  %s10 = sld [smem:[#allocation0]]
  $region54: #{neural_net_forward.1} parent=0
    _
  %s12 = ssub.s32 1, %s10
  %s13 = scalar_select 0, %s12, %s10
  $region1: #{neural_net_forward.1} parent=0
    #allocation2 [shape = 'u8[8192]{0}', space=vmem, size = 0x2000, scoped, tag = 'input window, operand 1, single buffered']
    #allocation3 [shape = 's32[1]{0}', space=sflag, size = 0x4, scoped, tag = 'scoped memory for neural_net_forward.1']
    #allocation4 [shape = 'u8[65536]{0}', space=vmem, size = 0x10000, scoped, tag = 'input window, operand 5, single buffered']
    #allocation5 [shape = 's32[1]{0}', space=sflag, size = 0x4, scoped, tag = 'scoped memory for neural_net_forward.1']
    %14 = vsyncpa [#allocation3], 0
    %15 = vsyncpa [#allocation5], 0
    // Predicated region
    $region2: #{neural_net_forward.1} parent=1 // pred_check
      _
    $region3: #{neural_net_forward.1} parent=1 // pred_check_branch
      %17 = sbr.rel (0) target = $region5
    $region4: #{neural_net_forward.1} parent=1 // pred_region
      _
    $region5: #{neural_net_forward.1} parent=1 // pred_fallthru
      _
    // Predicated region
    $region6: #{neural_net_forward.1} parent=1 // pred_check
      _
    $region7: #{neural_net_forward.1} parent=1 // pred_check_branch
      %19 = sbr.rel (0) target = $region9
    $region8: #{neural_net_forward.1} parent=1 // pred_region
      %s21 = ssub.s32 256, 256
      %22 = vsyncadd [#allocation3], %s21
      %s23 = sshll.u32 [#allocation2], 4
      %s24 = int_to_ptr.vmem [resolvable:$true] %s23
      %29 = dma.hbm_to_vmem [thread:$0]  %s1, 256, %s24, [#allocation3], 128, 128, 8
    $region9: #{neural_net_forward.1} parent=1 // pred_fallthru
      _
    // Predicated region
    $region10: #{neural_net_forward.1} parent=1 // pred_check
      _
    $region11: #{neural_net_forward.1} parent=1 // pred_check_branch
      %31 = sbr.rel (0) target = $region13
    $region12: #{neural_net_forward.1} parent=1 // pred_region
      _
    $region13: #{neural_net_forward.1} parent=1 // pred_fallthru
      _
    // Predicated region
    $region14: #{neural_net_forward.1} parent=1 // pred_check
      _
    $region15: #{neural_net_forward.1} parent=1 // pred_check_branch
      %33 = sbr.rel (0) target = $region17
    $region16: #{neural_net_forward.1} parent=1 // pred_region
      _
    $region17: #{neural_net_forward.1} parent=1 // pred_fallthru
      _
    // Predicated region
    $region18: #{neural_net_forward.1} parent=1 // pred_check
      _
    $region19: #{neural_net_forward.1} parent=1 // pred_check_branch
      %35 = sbr.rel (0) target = $region21
    $region20: #{neural_net_forward.1} parent=1 // pred_region
      _
    $region21: #{neural_net_forward.1} parent=1 // pred_fallthru
      _
    // Predicated region
    $region22: #{neural_net_forward.1} parent=1 // pred_check
      _
    $region23: #{neural_net_forward.1} parent=1 // pred_check_branch
      %37 = sbr.rel (0) target = $region25
    $region24: #{neural_net_forward.1} parent=1 // pred_region
      %s39 = ssub.s32 2048, 2048
      %40 = vsyncadd [#allocation5], %s39
      %s41 = sshll.u32 [#allocation4], 4
      %s42 = int_to_ptr.vmem [resolvable:$true] %s41
      %47 = dma.hbm_to_vmem [thread:$0]  %s5, 2048, %s42, [#allocation5], 128, 128, 8
    $region25: #{neural_net_forward.1} parent=1 // pred_fallthru
      _
    // Predicated region
    $region26: #{neural_net_forward.1} parent=1 // pred_check
      _
    $region27: #{neural_net_forward.1} parent=1 // pred_check_branch
      %49 = sbr.rel (0) target = $region29
    $region28: #{neural_net_forward.1} parent=1 // pred_region
      _
    $region29: #{neural_net_forward.1} parent=1 // pred_fallthru
      _
    // Predicated region
    $region30: #{neural_net_forward.1} parent=1 // pred_check
      _
    $region31: #{neural_net_forward.1} parent=1 // pred_check_branch
      %51 = sbr.rel (0) target = $region33
    $region32: #{neural_net_forward.1} parent=1 // pred_region
      _
    $region33: #{neural_net_forward.1} parent=1 // pred_fallthru
      _
    // Predicated region
    $region34: #{neural_net_forward.1} parent=1 // pred_check
      _
    $region35: #{neural_net_forward.1} parent=1 // pred_check_branch
      %53 = sbr.rel (0) target = $region37
    $region36: #{neural_net_forward.1} parent=1 // pred_region
      _
    $region37: #{neural_net_forward.1} parent=1 // pred_fallthru
      _
    // Predicated region
    $region38: #{neural_net_forward.1} parent=1 // pred_check
      _
    $region39: #{neural_net_forward.1} parent=1 // pred_check_branch
      %55 = sbr.rel (0) target = $region41
    $region40: #{neural_net_forward.1} parent=1 // pred_region
      %56 = dma.done [#allocation3], 256
    $region41: #{neural_net_forward.1} parent=1 // pred_fallthru
      _
    // Predicated region
    $region42: #{neural_net_forward.1} parent=1 // pred_check
      _
    $region43: #{neural_net_forward.1} parent=1 // pred_check_branch
      %58 = sbr.rel (0) target = $region45
    $region44: #{neural_net_forward.1} parent=1 // pred_region
      %59 = dma.done [#allocation5], 2048
    $region45: #{neural_net_forward.1} parent=1 // pred_fallthru
      _
    %v60 = vld [vmem:[%s0] sm:$0xff]
    %v61 = vld [vmem:[#allocation2] sm:$0xff]
    %v62 = vld [vmem:[#allocation2 + $0x8] sm:$0xff]
    %v63 = vld [vmem:[%s2] sm:$0x1]
    %v65 = vlaneseq
    %v66 = vshrl.u32 %v65, 7
    %v67 = vsub.s32 0, %v66
    %v68 = vrot.slane %v63, %v67
    %vm70 = vcmask 130048
    %v72 = vsel %vm70, %v60, 0
    %74 = vmatprep.subr.mxu0 0.0
    %75 = vmatpush1.msra.mxu0 %v61
    %76 = vmatprep.subr.mxu0 0.0
    %77 = vmatpush1.msra.mxu0 %v62
    %78 = vmatprep.subr.mxu0 0.0
    %79 = vmatpush1.msra.mxu0 0.0
    %80 = vmatprep.subr.mxu0 0.0
    %81 = vmatpush1.msra.mxu0 0.0
    %82 = vmatprep.subr.mxu0 0.0
    %83 = vmatpush1.msra.mxu0 0.0
    %84 = vmatprep.subr.mxu0 0.0
    %85 = vmatpush1.msra.mxu0 0.0
    %86 = vmatprep.subr.mxu0 0.0
    %87 = vmatpush1.msra.mxu0 0.0
    %88 = vmatprep.subr.mxu0 0.0
    %89 = vmatpush1.msra.mxu0 0.0
    %90 = vmatprep.subr.mxu0 0.0
    %91 = vmatpush1.msra.mxu0 0.0
    %92 = vmatprep.subr.mxu0 0.0
    %93 = vmatpush1.msra.mxu0 0.0
    %94 = vmatprep.subr.mxu0 0.0
    %95 = vmatpush1.msra.mxu0 0.0
    %96 = vmatprep.subr.mxu0 0.0
    %97 = vmatpush1.msra.mxu0 0.0
    %98 = vmatprep.subr.mxu0 0.0
    %99 = vmatpush1.msra.mxu0 0.0
    %100 = vmatprep.subr.mxu0 0.0
    %101 = vmatpush1.msra.mxu0 0.0
    %102 = vmatprep.subr.mxu0 0.0
    %103 = vmatpush1.msra.mxu0 0.0
    %104 = vmatprep.subr.mxu0 0.0
    %105 = vmatpush1.msra.mxu0 0.0
    %106 = vmatprep.subr.mxu0 0.0
    %107 = vmatpush1.msra.mxu0 0.0
    %108 = vmatprep.subr.mxu0 0.0
    %109 = vmatpush1.msra.mxu0 0.0
    %110 = vmatprep.subr.mxu0 0.0
    %111 = vmatpush1.msra.mxu0 0.0
    %112 = vmatprep.subr.mxu0 0.0
    %113 = vmatpush1.msra.mxu0 0.0
    %114 = vmatprep.subr.mxu0 0.0
    %115 = vmatpush1.msra.mxu0 0.0
    %116 = vmatprep.subr.mxu0 0.0
    %117 = vmatpush1.msra.mxu0 0.0
    %118 = vmatprep.subr.mxu0 0.0
    %119 = vmatpush1.msra.mxu0 0.0
    %120 = vmatprep.subr.mxu0 0.0
    %121 = vmatpush1.msra.mxu0 0.0
    %122 = vmatprep.subr.mxu0 0.0
    %123 = vmatpush1.msra.mxu0 0.0
    %124 = vmatprep.subr.mxu0 0.0
    %125 = vmatpush1.msra.mxu0 0.0
    %126 = vmatprep.subr.mxu0 0.0
    %127 = vmatpush1.msra.mxu0 0.0
    %128 = vmatprep.subr.mxu0 0.0
    %129 = vmatpush1.msra.mxu0 0.0
    %130 = vmatprep.subr.mxu0 0.0
    %131 = vmatpush1.msra.mxu0 0.0
    %132 = vmatprep.subr.mxu0 0.0
    %133 = vmatpush1.msra.mxu0 0.0
    %134 = vmatprep.subr.mxu0 0.0
    %135 = vmatpush1.msra.mxu0 0.0
    %136 = vmatprep.subr.mxu0 0.0
    %137 = vmatpush1.msra.mxu0 0.0
    %138 = vmatprep.mubr.f32.mxu0 0.0
    %139 = vmatmul.mubr.f32.gmra.mrb[0].mxu0 %v72
    %v140 = vpop.f32.mrb[0].mxu0
    %v141 = vadd.f32 %v68, %v140
    %v142 = vpop.f32.mrb[0].mxu0
    %143 = vdwg.mxu0
    %v144 = vxor.u32 %v141, 2147483648
    %v145 = vmul.f32 %v144, 1.442695
    %v146 = vpow.pop %v145
    %v147 = vadd.f32 %v146, 1.0
    %v148 = vrcp.pop %v147
    %v149 = vmul.f32 1.0, %v148
    %v150 = vld [vmem:[%s3] sm:$0xff]
    %v151 = vld [vmem:[%s3 + $0x8] sm:$0xff]
    %v152 = vld [vmem:[%s3 + $0x10] sm:$0xff]
    %v153 = vld [vmem:[%s3 + $0x18] sm:$0xff]
    %v154 = vld [vmem:[%s3 + $0x20] sm:$0xff]
    %v155 = vld [vmem:[%s3 + $0x28] sm:$0xff]
    %v156 = vld [vmem:[%s3 + $0x30] sm:$0xff]
    %v157 = vld [vmem:[%s3 + $0x38] sm:$0xff]
    %v158 = vld [vmem:[%s3 + $0x40] sm:$0xff]
    %v159 = vld [vmem:[%s3 + $0x48] sm:$0xff]
    %v160 = vld [vmem:[%s3 + $0x50] sm:$0xff]
    %v161 = vld [vmem:[%s3 + $0x58] sm:$0xff]
    %v162 = vld [vmem:[%s3 + $0x60] sm:$0xff]
    %v163 = vld [vmem:[%s3 + $0x68] sm:$0xff]
    %v164 = vld [vmem:[%s3 + $0x70] sm:$0xff]
    %v165 = vld [vmem:[%s3 + $0x78] sm:$0xff]
    %v166 = vld [vmem:[%s4] sm:$0x1]
    %v168 = vlaneseq
    %v169 = vshrl.u32 %v168, 7
    %v170 = vsub.s32 0, %v169
    %v171 = vrot.slane %v166, %v170
    %173 = vmatprep.subr.mxu0 0.0
    %174 = vmatpush1.msra.mxu0 %v150
    %175 = vmatprep.subr.mxu0 0.0
    %176 = vmatpush1.msra.mxu0 %v151
    %177 = vmatprep.subr.mxu0 0.0
    %178 = vmatpush1.msra.mxu0 %v152
    %179 = vmatprep.subr.mxu0 0.0
    %180 = vmatpush1.msra.mxu0 %v153
    %181 = vmatprep.subr.mxu0 0.0
    %182 = vmatpush1.msra.mxu0 %v154
    %183 = vmatprep.subr.mxu0 0.0
    %184 = vmatpush1.msra.mxu0 %v155
    %185 = vmatprep.subr.mxu0 0.0
    %186 = vmatpush1.msra.mxu0 %v156
    %187 = vmatprep.subr.mxu0 0.0
    %188 = vmatpush1.msra.mxu0 %v157
    %189 = vmatprep.subr.mxu0 0.0
    %190 = vmatpush1.msra.mxu0 %v158
    %191 = vmatprep.subr.mxu0 0.0
    %192 = vmatpush1.msra.mxu0 %v159
    %193 = vmatprep.subr.mxu0 0.0
    %194 = vmatpush1.msra.mxu0 %v160
    %195 = vmatprep.subr.mxu0 0.0
    %196 = vmatpush1.msra.mxu0 %v161
    %197 = vmatprep.subr.mxu0 0.0
    %198 = vmatpush1.msra.mxu0 %v162
    %199 = vmatprep.subr.mxu0 0.0
    %200 = vmatpush1.msra.mxu0 %v163
    %201 = vmatprep.subr.mxu0 0.0
    %202 = vmatpush1.msra.mxu0 %v164
    %203 = vmatprep.subr.mxu0 0.0
    %204 = vmatpush1.msra.mxu0 %v165
    %205 = vmatprep.subr.mxu0 0.0
    %206 = vmatpush1.msra.mxu0 0.0
    %207 = vmatprep.subr.mxu0 0.0
    %208 = vmatpush1.msra.mxu0 0.0
    %209 = vmatprep.subr.mxu0 0.0
    %210 = vmatpush1.msra.mxu0 0.0
    %211 = vmatprep.subr.mxu0 0.0
    %212 = vmatpush1.msra.mxu0 0.0
    %213 = vmatprep.subr.mxu0 0.0
    %214 = vmatpush1.msra.mxu0 0.0
    %215 = vmatprep.subr.mxu0 0.0
    %216 = vmatpush1.msra.mxu0 0.0
    %217 = vmatprep.subr.mxu0 0.0
    %218 = vmatpush1.msra.mxu0 0.0
    %219 = vmatprep.subr.mxu0 0.0
    %220 = vmatpush1.msra.mxu0 0.0
    %221 = vmatprep.subr.mxu0 0.0
    %222 = vmatpush1.msra.mxu0 0.0
    %223 = vmatprep.subr.mxu0 0.0
    %224 = vmatpush1.msra.mxu0 0.0
    %225 = vmatprep.subr.mxu0 0.0
    %226 = vmatpush1.msra.mxu0 0.0
    %227 = vmatprep.subr.mxu0 0.0
    %228 = vmatpush1.msra.mxu0 0.0
    %229 = vmatprep.subr.mxu0 0.0
    %230 = vmatpush1.msra.mxu0 0.0
    %231 = vmatprep.subr.mxu0 0.0
    %232 = vmatpush1.msra.mxu0 0.0
    %233 = vmatprep.subr.mxu0 0.0
    %234 = vmatpush1.msra.mxu0 0.0
    %235 = vmatprep.subr.mxu0 0.0
    %236 = vmatpush1.msra.mxu0 0.0
    %237 = vmatprep.mubr.f32.mxu0 0.0
    %238 = vmatmul.mubr.f32.gmra.mrb[0].mxu0 %v149
    %v239 = vpop.f32.mrb[0].mxu0
    %v240 = vadd.f32 %v171, %v239
    %v241 = vpop.f32.mrb[0].mxu0
    %242 = vdwg.mxu0
    %v243 = vxor.u32 %v240, 2147483648
    %v244 = vmul.f32 %v243, 1.442695
    %v245 = vpow.pop %v244
    %v246 = vadd.f32 %v245, 1.0
    %v247 = vrcp.pop %v246
    %v248 = vmul.f32 1.0, %v247
    %v249 = vld [vmem:[#allocation4] sm:$0xff]
    %v250 = vld [vmem:[#allocation4 + $0x8] sm:$0xff]
    %v251 = vld [vmem:[#allocation4 + $0x10] sm:$0xff]
    %v252 = vld [vmem:[#allocation4 + $0x18] sm:$0xff]
    %v253 = vld [vmem:[#allocation4 + $0x20] sm:$0xff]
    %v254 = vld [vmem:[#allocation4 + $0x28] sm:$0xff]
    %v255 = vld [vmem:[#allocation4 + $0x30] sm:$0xff]
    %v256 = vld [vmem:[#allocation4 + $0x38] sm:$0xff]
    %v257 = vld [vmem:[#allocation4 + $0x40] sm:$0xff]
    %v258 = vld [vmem:[#allocation4 + $0x48] sm:$0xff]
    %v259 = vld [vmem:[#allocation4 + $0x50] sm:$0xff]
    %v260 = vld [vmem:[#allocation4 + $0x58] sm:$0xff]
    %v261 = vld [vmem:[#allocation4 + $0x60] sm:$0xff]
    %v262 = vld [vmem:[#allocation4 + $0x68] sm:$0xff]
    %v263 = vld [vmem:[#allocation4 + $0x70] sm:$0xff]
    %v264 = vld [vmem:[#allocation4 + $0x78] sm:$0xff]
    %v265 = vld [vmem:[%s6] sm:$0x1]
    %v267 = vlaneseq
    %v268 = vshrl.u32 %v267, 7
    %v269 = vsub.s32 0, %v268
    %v270 = vrot.slane %v265, %v269
    %272 = vmatprep.subr.mxu0 0.0
    %273 = vmatpush1.msra.mxu0 %v249
    %274 = vmatprep.subr.mxu0 0.0
    %275 = vmatpush1.msra.mxu0 %v250
    %276 = vmatprep.subr.mxu0 0.0
    %277 = vmatpush1.msra.mxu0 %v251
    %278 = vmatprep.subr.mxu0 0.0
    %279 = vmatpush1.msra.mxu0 %v252
    %280 = vmatprep.subr.mxu0 0.0
    %281 = vmatpush1.msra.mxu0 %v253
    %282 = vmatprep.subr.mxu0 0.0
    %283 = vmatpush1.msra.mxu0 %v254
    %284 = vmatprep.subr.mxu0 0.0
    %285 = vmatpush1.msra.mxu0 %v255
    %286 = vmatprep.subr.mxu0 0.0
    %287 = vmatpush1.msra.mxu0 %v256
    %288 = vmatprep.subr.mxu0 0.0
    %289 = vmatpush1.msra.mxu0 %v257
    %290 = vmatprep.subr.mxu0 0.0
    %291 = vmatpush1.msra.mxu0 %v258
    %292 = vmatprep.subr.mxu0 0.0
    %293 = vmatpush1.msra.mxu0 %v259
    %294 = vmatprep.subr.mxu0 0.0
    %295 = vmatpush1.msra.mxu0 %v260
    %296 = vmatprep.subr.mxu0 0.0
    %297 = vmatpush1.msra.mxu0 %v261
    %298 = vmatprep.subr.mxu0 0.0
    %299 = vmatpush1.msra.mxu0 %v262
    %300 = vmatprep.subr.mxu0 0.0
    %301 = vmatpush1.msra.mxu0 %v263
    %302 = vmatprep.subr.mxu0 0.0
    %303 = vmatpush1.msra.mxu0 %v264
    %304 = vmatprep.subr.mxu0 0.0
    %305 = vmatpush1.msra.mxu0 0.0
    %306 = vmatprep.subr.mxu0 0.0
    %307 = vmatpush1.msra.mxu0 0.0
    %308 = vmatprep.subr.mxu0 0.0
    %309 = vmatpush1.msra.mxu0 0.0
    %310 = vmatprep.subr.mxu0 0.0
    %311 = vmatpush1.msra.mxu0 0.0
    %312 = vmatprep.subr.mxu0 0.0
    %313 = vmatpush1.msra.mxu0 0.0
    %314 = vmatprep.subr.mxu0 0.0
    %315 = vmatpush1.msra.mxu0 0.0
    %316 = vmatprep.subr.mxu0 0.0
    %317 = vmatpush1.msra.mxu0 0.0
    %318 = vmatprep.subr.mxu0 0.0
    %319 = vmatpush1.msra.mxu0 0.0
    %320 = vmatprep.subr.mxu0 0.0
    %321 = vmatpush1.msra.mxu0 0.0
    %322 = vmatprep.subr.mxu0 0.0
    %323 = vmatpush1.msra.mxu0 0.0
    %324 = vmatprep.subr.mxu0 0.0
    %325 = vmatpush1.msra.mxu0 0.0
    %326 = vmatprep.subr.mxu0 0.0
    %327 = vmatpush1.msra.mxu0 0.0
    %328 = vmatprep.subr.mxu0 0.0
    %329 = vmatpush1.msra.mxu0 0.0
    %330 = vmatprep.subr.mxu0 0.0
    %331 = vmatpush1.msra.mxu0 0.0
    %332 = vmatprep.subr.mxu0 0.0
    %333 = vmatpush1.msra.mxu0 0.0
    %334 = vmatprep.subr.mxu0 0.0
    %335 = vmatpush1.msra.mxu0 0.0
    %336 = vmatprep.mubr.f32.mxu0 0.0
    %337 = vmatmul.mubr.f32.gmra.mrb[0].mxu0 %v248
    %v338 = vpop.f32.mrb[0].mxu0
    %v339 = vadd.f32 %v270, %v338
    %v340 = vpop.f32.mrb[0].mxu0
    %341 = vdwg.mxu0
    %v342 = vxor.u32 %v339, 2147483648
    %v343 = vmul.f32 %v342, 1.442695
    %v344 = vpow.pop %v343
    %v345 = vadd.f32 %v344, 1.0
    %v346 = vrcp.pop %v345
    %v347 = vmul.f32 1.0, %v346
    %v348 = vld [vmem:[%s7] sm:$0xff]
    %v349 = vld [vmem:[%s7 + $0x8] sm:$0xff]
    %v350 = vld [vmem:[%s7 + $0x10] sm:$0xff]
    %v351 = vld [vmem:[%s7 + $0x18] sm:$0xff]
    %v352 = vld [vmem:[%s7 + $0x20] sm:$0xff]
    %v353 = vld [vmem:[%s7 + $0x28] sm:$0xff]
    %v354 = vld [vmem:[%s7 + $0x30] sm:$0xff]
    %v355 = vld [vmem:[%s7 + $0x38] sm:$0xff]
    %v356 = vld [vmem:[%s7 + $0x40] sm:$0xff]
    %v357 = vld [vmem:[%s7 + $0x48] sm:$0xff]
    %v358 = vld [vmem:[%s7 + $0x50] sm:$0xff]
    %v359 = vld [vmem:[%s7 + $0x58] sm:$0xff]
    %v360 = vld [vmem:[%s7 + $0x60] sm:$0xff]
    %v361 = vld [vmem:[%s7 + $0x68] sm:$0xff]
    %v362 = vld [vmem:[%s7 + $0x70] sm:$0xff]
    %v363 = vld [vmem:[%s7 + $0x78] sm:$0xff]
    %v364 = vld [vmem:[%s8] sm:$0x1]
    %v366 = vlaneseq
    %v367 = vshrl.u32 %v366, 7
    %v368 = vsub.s32 0, %v367
    %v369 = vrot.slane %v364, %v368
    %371 = vmatprep.subr.mxu0 0.0
    %372 = vmatpush1.msra.mxu0 %v348
    %373 = vmatprep.subr.mxu0 0.0
    %374 = vmatpush1.msra.mxu0 %v349
    %375 = vmatprep.subr.mxu0 0.0
    %376 = vmatpush1.msra.mxu0 %v350
    %377 = vmatprep.subr.mxu0 0.0
    %378 = vmatpush1.msra.mxu0 %v351
    %379 = vmatprep.subr.mxu0 0.0
    %380 = vmatpush1.msra.mxu0 %v352
    %381 = vmatprep.subr.mxu0 0.0
    %382 = vmatpush1.msra.mxu0 %v353
    %383 = vmatprep.subr.mxu0 0.0
    %384 = vmatpush1.msra.mxu0 %v354
    %385 = vmatprep.subr.mxu0 0.0
    %386 = vmatpush1.msra.mxu0 %v355
    %387 = vmatprep.subr.mxu0 0.0
    %388 = vmatpush1.msra.mxu0 %v356
    %389 = vmatprep.subr.mxu0 0.0
    %390 = vmatpush1.msra.mxu0 %v357
    %391 = vmatprep.subr.mxu0 0.0
    %392 = vmatpush1.msra.mxu0 %v358
    %393 = vmatprep.subr.mxu0 0.0
    %394 = vmatpush1.msra.mxu0 %v359
    %395 = vmatprep.subr.mxu0 0.0
    %396 = vmatpush1.msra.mxu0 %v360
    %397 = vmatprep.subr.mxu0 0.0
    %398 = vmatpush1.msra.mxu0 %v361
    %399 = vmatprep.subr.mxu0 0.0
    %400 = vmatpush1.msra.mxu0 %v362
    %401 = vmatprep.subr.mxu0 0.0
    %402 = vmatpush1.msra.mxu0 %v363
    %403 = vmatprep.subr.mxu0 0.0
    %404 = vmatpush1.msra.mxu0 0.0
    %405 = vmatprep.subr.mxu0 0.0
    %406 = vmatpush1.msra.mxu0 0.0
    %407 = vmatprep.subr.mxu0 0.0
    %408 = vmatpush1.msra.mxu0 0.0
    %409 = vmatprep.subr.mxu0 0.0
    %410 = vmatpush1.msra.mxu0 0.0
    %411 = vmatprep.subr.mxu0 0.0
    %412 = vmatpush1.msra.mxu0 0.0
    %413 = vmatprep.subr.mxu0 0.0
    %414 = vmatpush1.msra.mxu0 0.0
    %415 = vmatprep.subr.mxu0 0.0
    %416 = vmatpush1.msra.mxu0 0.0
    %417 = vmatprep.subr.mxu0 0.0
    %418 = vmatpush1.msra.mxu0 0.0
    %419 = vmatprep.subr.mxu0 0.0
    %420 = vmatpush1.msra.mxu0 0.0
    %421 = vmatprep.subr.mxu0 0.0
    %422 = vmatpush1.msra.mxu0 0.0
    %423 = vmatprep.subr.mxu0 0.0
    %424 = vmatpush1.msra.mxu0 0.0
    %425 = vmatprep.subr.mxu0 0.0
    %426 = vmatpush1.msra.mxu0 0.0
    %427 = vmatprep.subr.mxu0 0.0
    %428 = vmatpush1.msra.mxu0 0.0
    %429 = vmatprep.subr.mxu0 0.0
    %430 = vmatpush1.msra.mxu0 0.0
    %431 = vmatprep.subr.mxu0 0.0
    %432 = vmatpush1.msra.mxu0 0.0
    %433 = vmatprep.subr.mxu0 0.0
    %434 = vmatpush1.msra.mxu0 0.0
    %435 = vmatprep.mubr.f32.mxu0 0.0
    %436 = vmatmul.mubr.f32.gmra.mrb[0].mxu0 %v347
    %v437 = vpop.f32.mrb[0].mxu0
    %v438 = vadd.f32 %v369, %v437
    %v439 = vpop.f32.mrb[0].mxu0
    %440 = vdwg.mxu0
    %vm441 = vcmask 31744
    %442 = vst.msk [vmem:[%s9] sm:$0xff] %vm441, %v438
    // Predicated region
    $region46: #{neural_net_forward.1} parent=1 // pred_check
      _
    $region47: #{neural_net_forward.1} parent=1 // pred_check_branch
      %444 = sbr.rel (0) target = $region49
    $region48: #{neural_net_forward.1} parent=1 // pred_region
      _
    $region49: #{neural_net_forward.1} parent=1 // pred_fallthru
      _
    // Predicated region
    $region50: #{neural_net_forward.1} parent=1 // pred_check
      _
    $region51: #{neural_net_forward.1} parent=1 // pred_check_branch
      %446 = sbr.rel (0) target = $region53
    $region52: #{neural_net_forward.1} parent=1 // pred_region
      _
    $region53: #{neural_net_forward.1} parent=1 // pred_fallthru
      _
    %447 = vsyncpa [#allocation3], 1
    %448 = vsyncpa [#allocation5], 1

</llo_original>
